<compile_context>
chip_gen: v7x
topology: tpu7x:2x2x1
jax: 0.10.0
libtpu: 0.0.40
codegen_flags: <defaults>
</compile_context>

<pallas_src>
import jax
import jax.numpy as jnp
from jax.experimental import pallas as pl
from jax.experimental.pallas import tpu as pltpu  # noqa: F401  (kept for parity / future tuning)

IN_FEATURES = 768
NUM_CLASSES = 2
LANE_PAD = 128          # pad the 2-wide class axis to one full lane group
NEG_INF = -1e30         # finite large-negative pad bias (f32-safe)


# ----------------------------------------------------------------------------
# Pallas kernel: fused  log_softmax(x @ W + b)
# ----------------------------------------------------------------------------
def _nsp_head_kernel(x_ref, w_ref, b_ref, o_ref):
    # logits: MXU matmul with f32 accumulation, then bias add.
    logits = jnp.dot(x_ref[...], w_ref[...], preferred_element_type=jnp.float32)
    logits = logits + b_ref[...]
    # Row-wise log-softmax.  Padded columns have bias = -1e30, so
    # exp(logit - max) underflows to exactly 0 and they do not perturb the
    # normalizer for the 2 real classes.
    m = jnp.max(logits, axis=-1, keepdims=True)
    z = logits - m
    lse = jnp.log(jnp.sum(jnp.exp(z), axis=-1, keepdims=True))
    o_ref[...] = z - lse


def albert_nsp_head(x, w, b):
    """log_softmax(x @ w + b, axis=-1), matching AlbertNSPHead.forward.

    x: (..., 768) f32
    w: (768, 2)   f32  (nn.Linear weight, stored transposed as (in, out))
    b: (2,)       f32
    returns (..., 2) f32
    """
    lead = x.shape[:-1]
    m = 1
    for d in lead:
        m *= d
    x2 = x.reshape(m, IN_FEATURES)

    # Pad the class axis to 128 lanes; pad bias with -1e30 so padded columns
    # drop out of the softmax.  (Zero-padded weight columns are irrelevant.)
    w_pad = jnp.pad(w, ((0, 0), (0, LANE_PAD - NUM_CLASSES)))
    b_pad = jnp.concatenate(
        [b.astype(jnp.float32),
         jnp.full((LANE_PAD - NUM_CLASSES,), NEG_INF, jnp.float32)]
    ).reshape(1, LANE_PAD)

    out = pl.pallas_call(
        _nsp_head_kernel,
        out_shape=jax.ShapeDtypeStruct((m, LANE_PAD), jnp.float32),
        grid=(1,),
        in_specs=[
            pl.BlockSpec((m, IN_FEATURES), lambda i: (0, 0)),
            pl.BlockSpec((IN_FEATURES, LANE_PAD), lambda i: (0, 0)),
            pl.BlockSpec((1, LANE_PAD), lambda i: (0, 0)),
        ],
        out_specs=pl.BlockSpec((m, LANE_PAD), lambda i: (0, 0)),
    )(x2, w_pad, b_pad)

    return out[:, :NUM_CLASSES].reshape(*lead, NUM_CLASSES)


# ----------------------------------------------------------------------------
# Self-test
# ----------------------------------------------------------------------------
if __name__ == "__main__":
    key = jax.random.PRNGKey(0)
    kx, kw, kb = jax.random.split(key, 3)

    B = 8                                             # small, sublane-aligned batch
    x = jax.random.normal(kx, (B, IN_FEATURES), dtype=jnp.float32)
    # nn.Linear(768, 2) parameters (weight kept transposed as (in, out)).
    w = 0.02 * jax.random.normal(kw, (IN_FEATURES, NUM_CLASSES), dtype=jnp.float32)
    b = 0.02 * jax.random.normal(kb, (NUM_CLASSES,), dtype=jnp.float32)

    fwd = jax.jit(albert_nsp_head)
    y = fwd(x, w, b)
    jax.block_until_ready(y)

    # Pure-JAX reference of the nn.Module forward.
    ref = jax.nn.log_softmax(x @ w + b, axis=-1)

    assert y.shape == (B, NUM_CLASSES) and y.dtype == jnp.float32
    assert bool(jnp.all(jnp.isfinite(y)))
    assert bool(jnp.allclose(y, ref, atol=1e-5, rtol=1e-5))
    print("KERNEL_OK")
</pallas_src>

<mosaic_0001>
module attributes {stable_mosaic.version = 11 : i64} {
  func.func @_nsp_head_kernel(%arg0: i32, %arg1: memref<8x768xf32, #tpu.memory_space<vmem>>, %arg2: memref<768x128xf32, #tpu.memory_space<vmem>>, %arg3: memref<1x128xf32, #tpu.memory_space<vmem>>, %arg4: memref<8x128xf32, #tpu.memory_space<vmem>>) attributes {dimension_semantics = [#tpu.dimension_semantics<arbitrary>], iteration_bounds = array<i64: 1>, scalar_prefetch = 0 : i64, scratch_operands = 0 : i64, tpu.core_type = #tpu.core_type<tc>, window_params = [{pipeline_mode = #tpu.pipeline_mode<synchronous>, transform_indices = @transform_0, window_bounds = array<i64: 8, 768>}, {pipeline_mode = #tpu.pipeline_mode<synchronous>, transform_indices = @transform_1, window_bounds = array<i64: 768, 128>}, {pipeline_mode = #tpu.pipeline_mode<synchronous>, transform_indices = @transform_2, window_bounds = array<i64: 1, 128>}, {pipeline_mode = #tpu.pipeline_mode<synchronous>, transform_indices = @transform_3, window_bounds = array<i64: 8, 128>}]} {
    %c0 = arith.constant 0 : index
    %c0_0 = arith.constant 0 : index
    %0 = vector.load %arg1[%c0, %c0_0] : memref<8x768xf32, #tpu.memory_space<vmem>>, vector<8x768xf32>
    %c0_1 = arith.constant 0 : index
    %c0_2 = arith.constant 0 : index
    %1 = vector.load %arg2[%c0_1, %c0_2] : memref<768x128xf32, #tpu.memory_space<vmem>>, vector<768x128xf32>
    %cst = arith.constant dense<0.000000e+00> : vector<8x128xf32>
    %2 = tpu.matmul %0, %1, %cst {dimension_numbers = #tpu.dot_dimension_numbers<[1], [0], [0], [1], [0, 0, 1, 1], [], []>} : vector<8x768xf32>, vector<768x128xf32>, vector<8x128xf32> -> vector<8x128xf32>
    %c0_3 = arith.constant 0 : index
    %c0_4 = arith.constant 0 : index
    %3 = vector.load %arg3[%c0_3, %c0_4] : memref<1x128xf32, #tpu.memory_space<vmem>>, vector<1x128xf32>
    %4 = vector.broadcast %3 : vector<1x128xf32> to vector<8x128xf32>
    %5 = arith.addf %2, %4 : vector<8x128xf32>
    %cst_5 = arith.constant dense<0xFF800000> : vector<8xf32>
    %6 = vector.multi_reduction <maximumf>, %5, %cst_5 [1] : vector<8x128xf32> to vector<8xf32>
    %7 = vector.shape_cast %6 : vector<8xf32> to vector<8x1xf32>
    %8 = vector.broadcast %7 : vector<8x1xf32> to vector<8x128xf32>
    %9 = arith.subf %5, %8 : vector<8x128xf32>
    %10 = math.exp %9 : vector<8x128xf32>
    %cst_6 = arith.constant dense<0.000000e+00> : vector<8xf32>
    %11 = vector.multi_reduction <add>, %10, %cst_6 [1] : vector<8x128xf32> to vector<8xf32>
    %12 = vector.shape_cast %11 : vector<8xf32> to vector<8x1xf32>
    %13 = math.log %12 : vector<8x1xf32>
    %14 = vector.broadcast %13 : vector<8x1xf32> to vector<8x128xf32>
    %15 = arith.subf %9, %14 : vector<8x128xf32>
    %c0_7 = arith.constant 0 : index
    %c0_8 = arith.constant 0 : index
    %16 = vector.load %arg4[%c0_7, %c0_8] : memref<8x128xf32, #tpu.memory_space<vmem>>, vector<8x128xf32>
    tpu.vector_store %arg4[%c0_7, %c0_8], %15 {strides = array<i32>} : memref<8x128xf32, #tpu.memory_space<vmem>>, vector<8x128xf32>,
    return
  }
  func.func @transform_0(%arg0: i32) -> (i32, i32) {
    %c0_i32 = arith.constant 0 : i32
    %c0_i32_0 = arith.constant 0 : i32
    %c0_i32_1 = arith.constant 0 : i32
    return %c0_i32, %c0_i32_0 : i32, i32
  }
  func.func @transform_1(%arg0: i32) -> (i32, i32) {
    %c0_i32 = arith.constant 0 : i32
    %c0_i32_0 = arith.constant 0 : i32
    %c0_i32_1 = arith.constant 0 : i32
    return %c0_i32, %c0_i32_0 : i32, i32
  }
  func.func @transform_2(%arg0: i32) -> (i32, i32) {
    %c0_i32 = arith.constant 0 : i32
    %c0_i32_0 = arith.constant 0 : i32
    %c0_i32_1 = arith.constant 0 : i32
    return %c0_i32, %c0_i32_0 : i32, i32
  }
  func.func @transform_3(%arg0: i32) -> (i32, i32) {
    %c0_i32 = arith.constant 0 : i32
    %c0_i32_0 = arith.constant 0 : i32
    %c0_i32_1 = arith.constant 0 : i32
    return %c0_i32, %c0_i32_0 : i32, i32
  }
}

</mosaic_0001>

<llo_original>
// kernel: albert_nsp_head.1
$region0: #{albert_nsp_head.1}
  #allocation0 [shape = 'u32[]', space=smem, size = 0x4, offset = 0x4, fixed_abs, tag = 'smem constant byte address 0x4 - core index']
  #allocation1 [shape = 'u32[144,128]{1,0:T(1,128)}', space=vmem, size = 0x12000, scoped, tag = 'internal scratch']
  %s0 = inlined_call_operand.vmem [shape: f32[8,768], index: 0, kind: input, shape index: {}]
  %s1 = inlined_call_operand.vmem [shape: f32[768,128], index: 1, kind: input, shape index: {}]
  %s2 = inlined_call_operand.vmem [shape: f32[1,128], index: 2, kind: input, shape index: {}]
  %s3 = inlined_call_operand.vmem [shape: f32[8,128], index: 3, kind: output, shape index: {}]
  %s4 = sld [smem:[#allocation0]]
  $region22: #{albert_nsp_head.1} parent=0
    _
  %s6 = ssub.s32 1, %s4
  %s7 = scalar_select 0, %s6, %s4
  // Predicated region
  $region2: #{albert_nsp_head.1} parent=0 // pred_check
    _
  $region3: #{albert_nsp_head.1} parent=0 // pred_check_branch
    %9 = sbr.rel (0) target = $region5
  $region4: #{albert_nsp_head.1} parent=0 // pred_region
    _
  $region5: #{albert_nsp_head.1} parent=0 // pred_fallthru
    _
  // Predicated region
  $region6: #{albert_nsp_head.1} parent=0 // pred_check
    _
  $region7: #{albert_nsp_head.1} parent=0 // pred_check_branch
    %11 = sbr.rel (0) target = $region9
  $region8: #{albert_nsp_head.1} parent=0 // pred_region
    _
  $region9: #{albert_nsp_head.1} parent=0 // pred_fallthru
    _
  // Predicated region
  $region10: #{albert_nsp_head.1} parent=0 // pred_check
    _
  $region11: #{albert_nsp_head.1} parent=0 // pred_check_branch
    %13 = sbr.rel (0) target = $region13
  $region12: #{albert_nsp_head.1} parent=0 // pred_region
    _
  $region13: #{albert_nsp_head.1} parent=0 // pred_fallthru
    _
  %v14 = vld [vmem:[%s0] sm:$0xff]
  %v15 = vld [vmem:[%s0 + $0x8] sm:$0xff]
  %v16 = vld [vmem:[%s0 + $0x10] sm:$0xff]
  %v17 = vld [vmem:[%s0 + $0x18] sm:$0xff]
  %v18 = vld [vmem:[%s0 + $0x20] sm:$0xff]
  %v19 = vld [vmem:[%s0 + $0x28] sm:$0xff]
  %v20 = vld [vmem:[%s1] sm:$0xff]
  %v21 = vld [vmem:[%s1 + $0x8] sm:$0xff]
  %v22 = vld [vmem:[%s1 + $0x10] sm:$0xff]
  %v23 = vld [vmem:[%s1 + $0x18] sm:$0xff]
  %v24 = vld [vmem:[%s1 + $0x20] sm:$0xff]
  %v25 = vld [vmem:[%s1 + $0x28] sm:$0xff]
  %v26 = vld [vmem:[%s1 + $0x30] sm:$0xff]
  %v27 = vld [vmem:[%s1 + $0x38] sm:$0xff]
  %v28 = vld [vmem:[%s1 + $0x40] sm:$0xff]
  %v29 = vld [vmem:[%s1 + $0x48] sm:$0xff]
  %v30 = vld [vmem:[%s1 + $0x50] sm:$0xff]
  %v31 = vld [vmem:[%s1 + $0x58] sm:$0xff]
  %v32 = vld [vmem:[%s1 + $0x60] sm:$0xff]
  %v33 = vld [vmem:[%s1 + $0x68] sm:$0xff]
  %v34 = vld [vmem:[%s1 + $0x70] sm:$0xff]
  %v35 = vld [vmem:[%s1 + $0x78] sm:$0xff]
  %v36 = vld [vmem:[%s1 + $0x80] sm:$0xff]
  %v37 = vld [vmem:[%s1 + $0x88] sm:$0xff]
  %v38 = vld [vmem:[%s1 + $0x90] sm:$0xff]
  %v39 = vld [vmem:[%s1 + $0x98] sm:$0xff]
  %v40 = vld [vmem:[%s1 + $0xa0] sm:$0xff]
  %v41 = vld [vmem:[%s1 + $0xa8] sm:$0xff]
  %v42 = vld [vmem:[%s1 + $0xb0] sm:$0xff]
  %v43 = vld [vmem:[%s1 + $0xb8] sm:$0xff]
  %v44 = vld [vmem:[%s1 + $0xc0] sm:$0xff]
  %v45 = vld [vmem:[%s1 + $0xc8] sm:$0xff]
  %v46 = vld [vmem:[%s1 + $0xd0] sm:$0xff]
  %v47 = vld [vmem:[%s1 + $0xd8] sm:$0xff]
  %v48 = vld [vmem:[%s1 + $0xe0] sm:$0xff]
  %v49 = vld [vmem:[%s1 + $0xe8] sm:$0xff]
  %v50 = vld [vmem:[%s1 + $0xf0] sm:$0xff]
  %v51 = vld [vmem:[%s1 + $0xf8] sm:$0xff]
  %v52 = vld [vmem:[%s1 + $0x100] sm:$0xff]
  %v53 = vld [vmem:[%s1 + $0x108] sm:$0xff]
  %v54 = vld [vmem:[%s1 + $0x110] sm:$0xff]
  %v55 = vld [vmem:[%s1 + $0x118] sm:$0xff]
  %v56 = vld [vmem:[%s1 + $0x120] sm:$0xff]
  %v57 = vld [vmem:[%s1 + $0x128] sm:$0xff]
  %v58 = vld [vmem:[%s1 + $0x130] sm:$0xff]
  %v59 = vld [vmem:[%s1 + $0x138] sm:$0xff]
  %v60 = vld [vmem:[%s1 + $0x140] sm:$0xff]
  %v61 = vld [vmem:[%s1 + $0x148] sm:$0xff]
  %v62 = vld [vmem:[%s1 + $0x150] sm:$0xff]
  %v63 = vld [vmem:[%s1 + $0x158] sm:$0xff]
  %v64 = vld [vmem:[%s1 + $0x160] sm:$0xff]
  %v65 = vld [vmem:[%s1 + $0x168] sm:$0xff]
  %v66 = vld [vmem:[%s1 + $0x170] sm:$0xff]
  %v67 = vld [vmem:[%s1 + $0x178] sm:$0xff]
  %v68 = vld [vmem:[%s1 + $0x180] sm:$0xff]
  %v69 = vld [vmem:[%s1 + $0x188] sm:$0xff]
  %v70 = vld [vmem:[%s1 + $0x190] sm:$0xff]
  %v71 = vld [vmem:[%s1 + $0x198] sm:$0xff]
  %v72 = vld [vmem:[%s1 + $0x1a0] sm:$0xff]
  %v73 = vld [vmem:[%s1 + $0x1a8] sm:$0xff]
  %v74 = vld [vmem:[%s1 + $0x1b0] sm:$0xff]
  %v75 = vld [vmem:[%s1 + $0x1b8] sm:$0xff]
  %v76 = vld [vmem:[%s1 + $0x1c0] sm:$0xff]
  %v77 = vld [vmem:[%s1 + $0x1c8] sm:$0xff]
  %v78 = vld [vmem:[%s1 + $0x1d0] sm:$0xff]
  %v79 = vld [vmem:[%s1 + $0x1d8] sm:$0xff]
  %v80 = vld [vmem:[%s1 + $0x1e0] sm:$0xff]
  %v81 = vld [vmem:[%s1 + $0x1e8] sm:$0xff]
  %v82 = vld [vmem:[%s1 + $0x1f0] sm:$0xff]
  %v83 = vld [vmem:[%s1 + $0x1f8] sm:$0xff]
  %v84 = vld [vmem:[%s1 + $0x200] sm:$0xff]
  %v85 = vld [vmem:[%s1 + $0x208] sm:$0xff]
  %v86 = vld [vmem:[%s1 + $0x210] sm:$0xff]
  %v87 = vld [vmem:[%s1 + $0x218] sm:$0xff]
  %v88 = vld [vmem:[%s1 + $0x220] sm:$0xff]
  %v89 = vld [vmem:[%s1 + $0x228] sm:$0xff]
  %v90 = vld [vmem:[%s1 + $0x230] sm:$0xff]
  %v91 = vld [vmem:[%s1 + $0x238] sm:$0xff]
  %v92 = vld [vmem:[%s1 + $0x240] sm:$0xff]
  %v93 = vld [vmem:[%s1 + $0x248] sm:$0xff]
  %v94 = vld [vmem:[%s1 + $0x250] sm:$0xff]
  %v95 = vld [vmem:[%s1 + $0x258] sm:$0xff]
  %v96 = vld [vmem:[%s1 + $0x260] sm:$0xff]
  %v97 = vld [vmem:[%s1 + $0x268] sm:$0xff]
  %v98 = vld [vmem:[%s1 + $0x270] sm:$0xff]
  %v99 = vld [vmem:[%s1 + $0x278] sm:$0xff]
  %v100 = vld [vmem:[%s1 + $0x280] sm:$0xff]
  %v101 = vld [vmem:[%s1 + $0x288] sm:$0xff]
  %v102 = vld [vmem:[%s1 + $0x290] sm:$0xff]
  %v103 = vld [vmem:[%s1 + $0x298] sm:$0xff]
  %v104 = vld [vmem:[%s1 + $0x2a0] sm:$0xff]
  %v105 = vld [vmem:[%s1 + $0x2a8] sm:$0xff]
  %v106 = vld [vmem:[%s1 + $0x2b0] sm:$0xff]
  %v107 = vld [vmem:[%s1 + $0x2b8] sm:$0xff]
  %v108 = vld [vmem:[%s1 + $0x2c0] sm:$0xff]
  %v109 = vld [vmem:[%s1 + $0x2c8] sm:$0xff]
  %v110 = vld [vmem:[%s1 + $0x2d0] sm:$0xff]
  %v111 = vld [vmem:[%s1 + $0x2d8] sm:$0xff]
  %v112 = vld [vmem:[%s1 + $0x2e0] sm:$0xff]
  %v113 = vld [vmem:[%s1 + $0x2e8] sm:$0xff]
  %v114 = vld [vmem:[%s1 + $0x2f0] sm:$0xff]
  %v115 = vld [vmem:[%s1 + $0x2f8] sm:$0xff]
  %v116 = vld [vmem:[%s2] sm:$0x1]
  %v118 = vlaneseq
  %v119 = vshrl.u32 %v118, 7
  %v120 = vsub.s32 0, %v119
  %v121 = vrot.slane %v116, %v120
  %123 = vmatprep.subr.mxu0 0.0
  %124 = vmatpush1.msra.mxu0 %v20
  %125 = vmatprep.subr.mxu0 0.0
  %126 = vmatpush1.msra.mxu0 %v21
  %127 = vmatprep.subr.mxu0 0.0
  %128 = vmatpush1.msra.mxu0 %v22
  %129 = vmatprep.subr.mxu0 0.0
  %130 = vmatpush1.msra.mxu0 %v23
  %131 = vmatprep.subr.mxu0 0.0
  %132 = vmatpush1.msra.mxu0 %v24
  %133 = vmatprep.subr.mxu0 0.0
  %134 = vmatpush1.msra.mxu0 %v25
  %135 = vmatprep.subr.mxu0 0.0
  %136 = vmatpush1.msra.mxu0 %v26
  %137 = vmatprep.subr.mxu0 0.0
  %138 = vmatpush1.msra.mxu0 %v27
  %139 = vmatprep.subr.mxu0 0.0
  %140 = vmatpush1.msra.mxu0 %v28
  %141 = vmatprep.subr.mxu0 0.0
  %142 = vmatpush1.msra.mxu0 %v29
  %143 = vmatprep.subr.mxu0 0.0
  %144 = vmatpush1.msra.mxu0 %v30
  %145 = vmatprep.subr.mxu0 0.0
  %146 = vmatpush1.msra.mxu0 %v31
  %147 = vmatprep.subr.mxu0 0.0
  %148 = vmatpush1.msra.mxu0 %v32
  %149 = vmatprep.subr.mxu0 0.0
  %150 = vmatpush1.msra.mxu0 %v33
  %151 = vmatprep.subr.mxu0 0.0
  %152 = vmatpush1.msra.mxu0 %v34
  %153 = vmatprep.subr.mxu0 0.0
  %154 = vmatpush1.msra.mxu0 %v35
  %155 = vmatprep.subr.mxu0 0.0
  %156 = vmatpush1.msra.mxu0 %v36
  %157 = vmatprep.subr.mxu0 0.0
  %158 = vmatpush1.msra.mxu0 %v37
  %159 = vmatprep.subr.mxu0 0.0
  %160 = vmatpush1.msra.mxu0 %v38
  %161 = vmatprep.subr.mxu0 0.0
  %162 = vmatpush1.msra.mxu0 %v39
  %163 = vmatprep.subr.mxu0 0.0
  %164 = vmatpush1.msra.mxu0 %v40
  %165 = vmatprep.subr.mxu0 0.0
  %166 = vmatpush1.msra.mxu0 %v41
  %167 = vmatprep.subr.mxu0 0.0
  %168 = vmatpush1.msra.mxu0 %v42
  %169 = vmatprep.subr.mxu0 0.0
  %170 = vmatpush1.msra.mxu0 %v43
  %171 = vmatprep.subr.mxu0 0.0
  %172 = vmatpush1.msra.mxu0 %v44
  %173 = vmatprep.subr.mxu0 0.0
  %174 = vmatpush1.msra.mxu0 %v45
  %175 = vmatprep.subr.mxu0 0.0
  %176 = vmatpush1.msra.mxu0 %v46
  %177 = vmatprep.subr.mxu0 0.0
  %178 = vmatpush1.msra.mxu0 %v47
  %179 = vmatprep.subr.mxu0 0.0
  %180 = vmatpush1.msra.mxu0 %v48
  %181 = vmatprep.subr.mxu0 0.0
  %182 = vmatpush1.msra.mxu0 %v49
  %183 = vmatprep.subr.mxu0 0.0
  %184 = vmatpush1.msra.mxu0 %v50
  %185 = vmatprep.subr.mxu0 0.0
  %186 = vmatpush1.msra.mxu0 %v51
  %187 = vmatprep.mubr.f32.mxu0 %v15
  %188 = vmatmul.mubr.f32.gmra.mrb[0].mxu0 %v14
  %v189 = vpop.f32.mrb[0].mxu0
  %v190 = vadd.f32 %v121, %v189
  %v191 = vpop.f32.mrb[0].mxu0
  %192 = vdwg.mxu0
  %193 = vmatprep.subr.mxu0 0.0
  %194 = vmatpush1.msra.mxu0 %v52
  %195 = vmatprep.subr.mxu0 0.0
  %196 = vmatpush1.msra.mxu0 %v53
  %197 = vmatprep.subr.mxu0 0.0
  %198 = vmatpush1.msra.mxu0 %v54
  %199 = vmatprep.subr.mxu0 0.0
  %200 = vmatpush1.msra.mxu0 %v55
  %201 = vmatprep.subr.mxu0 0.0
  %202 = vmatpush1.msra.mxu0 %v56
  %203 = vmatprep.subr.mxu0 0.0
  %204 = vmatpush1.msra.mxu0 %v57
  %205 = vmatprep.subr.mxu0 0.0
  %206 = vmatpush1.msra.mxu0 %v58
  %207 = vmatprep.subr.mxu0 0.0
  %208 = vmatpush1.msra.mxu0 %v59
  %209 = vmatprep.subr.mxu0 0.0
  %210 = vmatpush1.msra.mxu0 %v60
  %211 = vmatprep.subr.mxu0 0.0
  %212 = vmatpush1.msra.mxu0 %v61
  %213 = vmatprep.subr.mxu0 0.0
  %214 = vmatpush1.msra.mxu0 %v62
  %215 = vmatprep.subr.mxu0 0.0
  %216 = vmatpush1.msra.mxu0 %v63
  %217 = vmatprep.subr.mxu0 0.0
  %218 = vmatpush1.msra.mxu0 %v64
  %219 = vmatprep.subr.mxu0 0.0
  %220 = vmatpush1.msra.mxu0 %v65
  %221 = vmatprep.subr.mxu0 0.0
  %222 = vmatpush1.msra.mxu0 %v66
  %223 = vmatprep.subr.mxu0 0.0
  %224 = vmatpush1.msra.mxu0 %v67
  %225 = vmatprep.subr.mxu0 0.0
  %226 = vmatpush1.msra.mxu0 %v68
  %227 = vmatprep.subr.mxu0 0.0
  %228 = vmatpush1.msra.mxu0 %v69
  %229 = vmatprep.subr.mxu0 0.0
  %230 = vmatpush1.msra.mxu0 %v70
  %231 = vmatprep.subr.mxu0 0.0
  %232 = vmatpush1.msra.mxu0 %v71
  %233 = vmatprep.subr.mxu0 0.0
  %234 = vmatpush1.msra.mxu0 %v72
  %235 = vmatprep.subr.mxu0 0.0
  %236 = vmatpush1.msra.mxu0 %v73
  %237 = vmatprep.subr.mxu0 0.0
  %238 = vmatpush1.msra.mxu0 %v74
  %239 = vmatprep.subr.mxu0 0.0
  %240 = vmatpush1.msra.mxu0 %v75
  %241 = vmatprep.subr.mxu0 0.0
  %242 = vmatpush1.msra.mxu0 %v76
  %243 = vmatprep.subr.mxu0 0.0
  %244 = vmatpush1.msra.mxu0 %v77
  %245 = vmatprep.subr.mxu0 0.0
  %246 = vmatpush1.msra.mxu0 %v78
  %247 = vmatprep.subr.mxu0 0.0
  %248 = vmatpush1.msra.mxu0 %v79
  %249 = vmatprep.subr.mxu0 0.0
  %250 = vmatpush1.msra.mxu0 %v80
  %251 = vmatprep.subr.mxu0 0.0
  %252 = vmatpush1.msra.mxu0 %v81
  %253 = vmatprep.subr.mxu0 0.0
  %254 = vmatpush1.msra.mxu0 %v82
  %255 = vmatprep.subr.mxu0 0.0
  %256 = vmatpush1.msra.mxu0 %v83
  %257 = vmatprep.mubr.f32.mxu0 %v17
  %258 = vmatmul.mubr.f32.gmra.mrb[0].mxu0 %v16
  %v259 = vpop.f32.mrb[0].mxu0
  %v260 = vadd.f32 %v190, %v259
  %v261 = vpop.f32.mrb[0].mxu0
  %262 = vdwg.mxu0
  %263 = vmatprep.subr.mxu0 0.0
  %264 = vmatpush1.msra.mxu0 %v84
  %265 = vmatprep.subr.mxu0 0.0
  %266 = vmatpush1.msra.mxu0 %v85
  %267 = vmatprep.subr.mxu0 0.0
  %268 = vmatpush1.msra.mxu0 %v86
  %269 = vmatprep.subr.mxu0 0.0
  %270 = vmatpush1.msra.mxu0 %v87
  %271 = vmatprep.subr.mxu0 0.0
  %272 = vmatpush1.msra.mxu0 %v88
  %273 = vmatprep.subr.mxu0 0.0
  %274 = vmatpush1.msra.mxu0 %v89
  %275 = vmatprep.subr.mxu0 0.0
  %276 = vmatpush1.msra.mxu0 %v90
  %277 = vmatprep.subr.mxu0 0.0
  %278 = vmatpush1.msra.mxu0 %v91
  %279 = vmatprep.subr.mxu0 0.0
  %280 = vmatpush1.msra.mxu0 %v92
  %281 = vmatprep.subr.mxu0 0.0
  %282 = vmatpush1.msra.mxu0 %v93
  %283 = vmatprep.subr.mxu0 0.0
  %284 = vmatpush1.msra.mxu0 %v94
  %285 = vmatprep.subr.mxu0 0.0
  %286 = vmatpush1.msra.mxu0 %v95
  %287 = vmatprep.subr.mxu0 0.0
  %288 = vmatpush1.msra.mxu0 %v96
  %289 = vmatprep.subr.mxu0 0.0
  %290 = vmatpush1.msra.mxu0 %v97
  %291 = vmatprep.subr.mxu0 0.0
  %292 = vmatpush1.msra.mxu0 %v98
  %293 = vmatprep.subr.mxu0 0.0
  %294 = vmatpush1.msra.mxu0 %v99
  %295 = vmatprep.subr.mxu0 0.0
  %296 = vmatpush1.msra.mxu0 %v100
  %297 = vmatprep.subr.mxu0 0.0
  %298 = vmatpush1.msra.mxu0 %v101
  %299 = vmatprep.subr.mxu0 0.0
  %300 = vmatpush1.msra.mxu0 %v102
  %301 = vmatprep.subr.mxu0 0.0
  %302 = vmatpush1.msra.mxu0 %v103
  %303 = vmatprep.subr.mxu0 0.0
  %304 = vmatpush1.msra.mxu0 %v104
  %305 = vmatprep.subr.mxu0 0.0
  %306 = vmatpush1.msra.mxu0 %v105
  %307 = vmatprep.subr.mxu0 0.0
  %308 = vmatpush1.msra.mxu0 %v106
  %309 = vmatprep.subr.mxu0 0.0
  %310 = vmatpush1.msra.mxu0 %v107
  %311 = vmatprep.subr.mxu0 0.0
  %312 = vmatpush1.msra.mxu0 %v108
  %313 = vmatprep.subr.mxu0 0.0
  %314 = vmatpush1.msra.mxu0 %v109
  %315 = vmatprep.subr.mxu0 0.0
  %316 = vmatpush1.msra.mxu0 %v110
  %317 = vmatprep.subr.mxu0 0.0
  %318 = vmatpush1.msra.mxu0 %v111
  %319 = vmatprep.subr.mxu0 0.0
  %320 = vmatpush1.msra.mxu0 %v112
  %321 = vmatprep.subr.mxu0 0.0
  %322 = vmatpush1.msra.mxu0 %v113
  %323 = vmatprep.subr.mxu0 0.0
  %324 = vmatpush1.msra.mxu0 %v114
  %325 = vmatprep.subr.mxu0 0.0
  %326 = vmatpush1.msra.mxu0 %v115
  %327 = vmatprep.mubr.f32.mxu0 %v19
  %328 = vmatmul.mubr.f32.gmra.mrb[0].mxu0 %v18
  %v329 = vpop.f32.mrb[0].mxu0
  %v330 = vadd.f32 %v260, %v329
  %v331 = vpop.f32.mrb[0].mxu0
  %332 = vdwg.mxu0
  %333 = vmax.xlane.f32.xlu0 %v330
  %v334 = vpop.xlane.xlu0 %333
  %v335 = vsub.f32 %v330, %v334
  %v336 = vmul.f32 %v335, 1.442695
  %v337 = vpow.pop %v336
  %338 = vadd.xlane.f32.xlu0 %v337
  %v339 = vpop.xlane.xlu0 %338
  %v340 = vlog2.pop %v339
  %v341 = vmul.f32 %v340, 0.6931472
  %v342 = vsub.f32 %v335, %v341
  %343 = vst [vmem:[%s3] sm:$0xff] %v342
  // Predicated region
  $region14: #{albert_nsp_head.1} parent=0 // pred_check
    _
  $region15: #{albert_nsp_head.1} parent=0 // pred_check_branch
    %345 = sbr.rel (0) target = $region17
  $region16: #{albert_nsp_head.1} parent=0 // pred_region
    _
  $region17: #{albert_nsp_head.1} parent=0 // pred_fallthru
    _
  // Predicated region
  $region18: #{albert_nsp_head.1} parent=0 // pred_check
    _
  $region19: #{albert_nsp_head.1} parent=0 // pred_check_branch
    %347 = sbr.rel (0) target = $region21
  $region20: #{albert_nsp_head.1} parent=0 // pred_region
    _
  $region21: #{albert_nsp_head.1} parent=0 // pred_fallthru
    _

</llo_original>
